<compile_context>
chip_gen: v5e
topology: v5e:2x2
jax: 0.10.0
libtpu: 0.0.40
codegen_flags: <defaults>
</compile_context>

<pallas_src>
import functools

import jax
import jax.numpy as jnp
from jax.experimental import pallas as pl
from jax.experimental.pallas import tpu as pltpu


def _round_up(x, m):
    return ((x + m - 1) // m) * m


def _cdiv(a, b):
    return (a + b - 1) // b


def _gelu_tanh(x):
    # TODO(synk): PyTorch F.gelu defaults to exact erf GELU; Mosaic has no erf
    # lowering, so we use the tanh approximation (max abs deviation ~1e-3 / element).
    return 0.5 * x * (1.0 + jnp.tanh(0.7978845608028654 * (x + 0.044715 * x * x * x)))


def _device_vmem_bytes():
    """Physical VMEM capacity of the attached TPU (fallback: 128 MiB)."""
    try:  # capability query only -- never masks kernel compile/runtime errors
        cap = getattr(pltpu.get_tpu_info(), "vmem_capacity_bytes", None)
        if cap:
            return int(cap)
    except Exception:
        pass
    return 128 * 1024 * 1024


def _supports_single_buffering():
    """Explicit capability check for pl.BlockSpec(..., pipeline_mode=pl.Buffered(1))."""
    if not hasattr(pl, "Buffered"):
        return False
    try:
        pl.BlockSpec((8, 128), lambda i, c: (0, 0), pipeline_mode=pl.Buffered(1))
    except TypeError:
        return False
    return True


def _patch_merger_kernel(x_ref, lnw_ref, lnb_ref, w1_ref, b1_ref, w2_ref, b2_ref,
                         o_ref, xn_ref, *acc_scratch, e, m2, eps, single_chunk):
    """Grid = (row_tile i [parallel], H_chunk c [arbitrary]).

    x_ref  : (tile_n, H)      merged-token rows (H = e * m2), input dtype
    lnw/lnb: (1, e)
    w1     : (H, tile_h)      fc1 column slab,   b1: (1, tile_h)
    w2     : (tile_h, D_pad)  fc2 row slab,      b2: (1, D_pad)
    o_ref  : (tile_n, D_pad)
    xn_ref : (tile_n, H)      LayerNormed rows in weight dtype (VMEM scratch)
    acc    : (tile_n, D_pad)  f32 fc2 accumulator (only when H is chunked)
    """
    c = pl.program_id(1)

    @pl.when(c == 0)
    def _layernorm():
        lnw = lnw_ref[...].astype(jnp.float32)
        lnb = lnb_ref[...].astype(jnp.float32)
        x = x_ref[...]                       # native dtype; upcast per E-chunk only
        lane_aligned = (e % 128 == 0)
        chunks = []
        for j in range(m2):                  # per-original-token LayerNorm
            xj = x[:, j * e:(j + 1) * e].astype(jnp.float32)
            mu = jnp.mean(xj, axis=-1, keepdims=True)
            xc = xj - mu
            var = jnp.mean(xc * xc, axis=-1, keepdims=True)
            yj = (xc * jax.lax.rsqrt(var + eps) * lnw + lnb).astype(xn_ref.dtype)
            if lane_aligned:
                xn_ref[:, j * e:(j + 1) * e] = yj      # lane-aligned slab store
            else:
                chunks.append(yj)
        if not lane_aligned:
            # Small / non-128-multiple E: one native-dtype concat (no f32 temporaries).
            xn_ref[...] = jnp.concatenate(chunks, axis=-1)

    # fc1 column slab (single K=H dot at native weight dtype) -> gelu -> fc2 partial.
    h1 = jnp.dot(xn_ref[...], w1_ref[...], preferred_element_type=jnp.float32)
    h1 = h1 + b1_ref[...].astype(jnp.float32)
    g = _gelu_tanh(h1)
    part = jnp.dot(g.astype(w2_ref.dtype), w2_ref[...],
                   preferred_element_type=jnp.float32)

    if single_chunk:
        # Whole-H path: no accumulator scratch; write the output tile directly.
        o_ref[...] = (part + b2_ref[...].astype(jnp.float32)).astype(o_ref.dtype)
    else:
        acc_ref = acc_scratch[0]

        @pl.when(c == 0)
        def _init():
            acc_ref[...] = part

        @pl.when(c > 0)
        def _accumulate():
            acc_ref[...] += part

        @pl.when(c == pl.num_programs(1) - 1)
        def _finalize():
            o_ref[...] = (acc_ref[...] + b2_ref[...].astype(jnp.float32)
                          ).astype(o_ref.dtype)


def qwen2vl_patch_merger(hidden_states, ln_w, ln_b, w1, b1, w2, b2, *,
                         spatial_merge_size, tile_n=None, tile_h=None, eps=1e-6):
    S, E = hidden_states.shape
    M2 = spatial_merge_size ** 2
    assert S % M2 == 0, "patch count must be divisible by spatial_merge_size**2"
    H = E * M2
    N = S // M2
    D = w2.shape[1]
    assert w1.shape == (H, H) and b1.shape == (H,)
    assert w2.shape == (H, D) and b2.shape == (D,)
    out_dtype = hidden_states.dtype

    xb = jnp.dtype(hidden_states.dtype).itemsize
    wb = jnp.dtype(w1.dtype).itemsize
    ob = jnp.dtype(out_dtype).itemsize
    D_pad = _round_up(D, 128)                 # lane-dense output stores

    # ---- generation-aware VMEM budget --------------------------------------
    cap = _device_vmem_bytes()                # 128 MiB (v5e/v6e) / 64 MiB (v7x)
    budget = max(cap - 8 * 1024 * 1024, cap * 3 // 4)
    single_buf_ok = _supports_single_buffering()

    def working_set(tn, th, w_bufs, with_acc):
        ws = 2 * tn * H * xb                                     # x tile (dbl-buffered)
        ws += w_bufs * (H * th + th * D_pad + th + D_pad) * wb   # W1/W2 slabs + biases
        ws += 4 * E * max(wb, 4)                                 # LN params
        ws += 2 * tn * D_pad * ob                                # output tile
        ws += tn * H * wb                                        # xn scratch
        if with_acc:
            ws += tn * D_pad * 4                                 # f32 fc2 accumulator
        ws += tn * th * 4 + tn * D_pad * 4                       # in-kernel f32 temps
        return ws

    # ---- weight chunking (tile_h) -------------------------------------------
    if tile_h is not None:
        tile_h = int(tile_h)
        assert tile_h == H or (H % tile_h == 0 and tile_h % 128 == 0)
    else:
        w_bufs_res = 1 if single_buf_ok else 2
        if working_set(256, H, w_bufs_res, False) <= budget:
            tile_h = H            # W1/W2 resident across the whole grid (v5e/v6e win)
        else:
            tile_h = None         # stream weight slabs (v7x / f32 weights)
            for cand in (2048, 1024, 512, 256, 128):   # prefer big K for the fc2 dot
                if (cand < H and H % cand == 0
                        and working_set(128, cand, 2, True) <= budget):
                    tile_h = cand
                    break
            if tile_h is None:
                tile_h = H
    n_chunks = H // tile_h
    single_chunk = (n_chunks == 1)
    weights_invariant = single_chunk
    w_bufs = 1 if (weights_invariant and single_buf_ok) else 2

    # ---- row tiling (tile_n) --------------------------------------------------
    pack = max(8, 32 // xb)                   # sublane packing: f32 8, bf16 16, i8 32
    if tile_n is None:
        tile_n = 512 if n_chunks > 1 else 256  # amortize weight streaming over rows
    tile_n = max(pack, min(int(tile_n), _round_up(N, pack)))
    tile_n = _round_up(tile_n, pack)
    if N > 2 * pack and _cdiv(N, tile_n) < 2:
        # >= 2 row tiles so the "parallel" axis can span both v7x TensorCores.
        tile_n = _round_up(_cdiv(N, 2), pack)
    while (tile_n > pack and
           working_set(tile_n, tile_h, w_bufs, not single_chunk) > budget):
        tile_n = max(pack, _round_up(tile_n // 2, pack))

    N_pad = _round_up(N, tile_n)
    grid = (N_pad // tile_n, n_chunks)

    # ---- layout glue (the torch .view merge + padding) ------------------------
    # TODO(synk): in a serving setup, hoist the W2/b2 pad (and any f32->bf16 weight
    # cast) out of the per-call wrapper; here it runs once per script invocation.
    x_m = hidden_states.reshape(N, H)
    if N_pad != N:
        x_m = jnp.pad(x_m, ((0, N_pad - N), (0, 0)))
    if D_pad != D:
        w2p = jnp.pad(w2, ((0, 0), (0, D_pad - D)))
        b2p = jnp.pad(b2, (0, D_pad - D))
    else:
        w2p, b2p = w2, b2
    lnw2 = ln_w.reshape(1, E)
    lnb2 = ln_b.reshape(1, E)
    b1_2 = b1.reshape(1, H)
    b2_2 = b2p.reshape(1, D_pad)

    kernel = functools.partial(_patch_merger_kernel, e=E, m2=M2, eps=eps,
                               single_chunk=single_chunk)

    def _run(use_single_buffer):
        wb_eff = 1 if (weights_invariant and use_single_buffer) else 2
        vmem_limit = int(min(budget, max(
            int(working_set(tile_n, tile_h, wb_eff, not single_chunk) * 1.3),
            32 * 1024 * 1024)))

        def spec(shape, imap, invariant=False):
            if use_single_buffer and invariant:
                return pl.BlockSpec(shape, imap, pipeline_mode=pl.Buffered(1))
            return pl.BlockSpec(shape, imap)

        in_specs = [
            pl.BlockSpec((tile_n, H), lambda i, c: (i, 0)),               # merged tokens
            spec((1, E), lambda i, c: (0, 0), True),                      # ln weight
            spec((1, E), lambda i, c: (0, 0), True),                      # ln bias
            spec((H, tile_h), lambda i, c: (0, c), weights_invariant),    # fc1 W slab
            spec((1, tile_h), lambda i, c: (0, c), weights_invariant),    # fc1 bias slab
            spec((tile_h, D_pad), lambda i, c: (c, 0), weights_invariant),  # fc2 W slab
            spec((1, D_pad), lambda i, c: (0, 0), True),                  # fc2 bias
        ]
        scratch = [pltpu.VMEM((tile_n, H), w1.dtype)]                     # LN output
        if not single_chunk:
            scratch.append(pltpu.VMEM((tile_n, D_pad), jnp.float32))      # fc2 acc

        return pl.pallas_call(
            kernel,
            out_shape=jax.ShapeDtypeStruct((N_pad, D_pad), out_dtype),
            grid_spec=pltpu.PrefetchScalarGridSpec(
                num_scalar_prefetch=0,
                grid=grid,
                in_specs=in_specs,
                out_specs=pl.BlockSpec((tile_n, D_pad), lambda i, c: (i, 0)),
                scratch_shapes=scratch),
            compiler_params=pltpu.CompilerParams(
                dimension_semantics=("parallel", "arbitrary"),
                vmem_limit_bytes=vmem_limit),
        )(x_m, lnw2, lnb2, w1, b1_2, w2p, b2_2)

    if single_buf_ok:
        try:
            out = _run(True)
        except (pltpu.LoweringException, NotImplementedError, TypeError, ValueError):
            # Narrow fallback: only when this Mosaic build rejects pl.Buffered(1)
            # lowering. VMEM OOM / genuine runtime errors propagate unchanged.
            out = _run(False)
    else:
        out = _run(False)

    return out[:N, :D]


def _reference(hidden_states, ln_w, ln_b, w1, b1, w2, b2, *,
               spatial_merge_size, eps=1e-6):
    f32 = jnp.float32
    S, E = hidden_states.shape
    M2 = spatial_merge_size ** 2
    x = hidden_states.astype(f32)
    mu = jnp.mean(x, axis=-1, keepdims=True)
    var = jnp.mean((x - mu) ** 2, axis=-1, keepdims=True)
    x = (x - mu) * jax.lax.rsqrt(var + eps) * ln_w.astype(f32) + ln_b.astype(f32)
    x = x.reshape(S // M2, E * M2)
    x = _gelu_tanh(x @ w1.astype(f32) + b1.astype(f32))
    x = x @ w2.astype(f32) + b2.astype(f32)
    return x  # f32 reference


if __name__ == "__main__":
    def make_inputs(key, seq, embed_dim, merge, out_dim, dtype):
        hidden = embed_dim * merge ** 2
        ks = jax.random.split(key, 7)
        x = jax.random.normal(ks[0], (seq, embed_dim), jnp.float32)
        ln_w = 1.0 + 0.1 * jax.random.normal(ks[1], (embed_dim,), jnp.float32)
        ln_b = 0.1 * jax.random.normal(ks[2], (embed_dim,), jnp.float32)
        w1 = 0.05 * jax.random.normal(ks[3], (hidden, hidden), jnp.float32)
        b1 = 0.05 * jax.random.normal(ks[4], (hidden,), jnp.float32)
        w2 = 0.05 * jax.random.normal(ks[5], (hidden, out_dim), jnp.float32)
        b2 = 0.05 * jax.random.normal(ks[6], (out_dim,), jnp.float32)
        return tuple(t.astype(dtype) for t in (x, ln_w, ln_b, w1, b1, w2, b2))

    # 1) f32, non-lane-aligned E, whole-resident weights (single H chunk, direct out).
    args = make_inputs(jax.random.PRNGKey(0), seq=64, embed_dim=32, merge=2,
                       out_dim=64, dtype=jnp.float32)
    out = jax.block_until_ready(qwen2vl_patch_merger(*args, spatial_merge_size=2))
    ref = _reference(*args, spatial_merge_size=2)
    assert out.shape == (16, 64)
    assert jnp.allclose(out.astype(jnp.float32), ref, atol=1e-4, rtol=1e-4), \
        float(jnp.max(jnp.abs(out.astype(jnp.float32) - ref)))

    # 2) bf16, ragged row count, explicit H-chunked (weight-streaming) accumulation.
    args = make_inputs(jax.random.PRNGKey(1), seq=100, embed_dim=64, merge=2,
                       out_dim=256, dtype=jnp.bfloat16)
    out2 = jax.block_until_ready(
        qwen2vl_patch_merger(*args, spatial_merge_size=2, tile_n=256, tile_h=128))
    ref2 = _reference(*args, spatial_merge_size=2)
    assert out2.shape == (25, 256)
    err2 = float(jnp.max(jnp.abs(out2.astype(jnp.float32) - ref2)))
    assert err2 < 3e-2, err2

    # 3) bf16, lane-aligned E (per-chunk LN slab stores), fully automatic tiling.
    args = make_inputs(jax.random.PRNGKey(2), seq=32, embed_dim=128, merge=2,
                       out_dim=256, dtype=jnp.bfloat16)
    out3 = jax.block_until_ready(qwen2vl_patch_merger(*args, spatial_merge_size=2))
    ref3 = _reference(*args, spatial_merge_size=2)
    assert out3.shape == (8, 256)
    err3 = float(jnp.max(jnp.abs(out3.astype(jnp.float32) - ref3)))
    assert err3 < 6e-2, err3

    print("KERNEL_OK")
</pallas_src>

<mosaic_0001>
module attributes {stable_mosaic.version = 11 : i64} {
  func.func @_patch_merger_kernel(%arg0: i32, %arg1: i32, %arg2: memref<16x128xf32, #tpu.memory_space<vmem>>, %arg3: memref<1x32xf32, #tpu.memory_space<vmem>>, %arg4: memref<1x32xf32, #tpu.memory_space<vmem>>, %arg5: memref<128x128xf32, #tpu.memory_space<vmem>>, %arg6: memref<1x128xf32, #tpu.memory_space<vmem>>, %arg7: memref<128x128xf32, #tpu.memory_space<vmem>>, %arg8: memref<1x128xf32, #tpu.memory_space<vmem>>, %arg9: memref<16x128xf32, #tpu.memory_space<vmem>>, %arg10: memref<16x128xf32, #tpu.memory_space<vmem>>) attributes {dimension_semantics = [#tpu.dimension_semantics<parallel>, #tpu.dimension_semantics<arbitrary>], iteration_bounds = array<i64: 1, 1>, scalar_prefetch = 0 : i64, scratch_operands = 1 : i64, tpu.core_type = #tpu.core_type<tc>, window_params = [{transform_indices = @transform_0, window_bounds = array<i64: 16, 128>}, {pipeline_mode = #tpu.pipeline_mode<synchronous>, transform_indices = @transform_1, window_bounds = array<i64: 1, 32>}, {pipeline_mode = #tpu.pipeline_mode<synchronous>, transform_indices = @transform_2, window_bounds = array<i64: 1, 32>}, {pipeline_mode = #tpu.pipeline_mode<synchronous>, transform_indices = @transform_3, window_bounds = array<i64: 128, 128>}, {pipeline_mode = #tpu.pipeline_mode<synchronous>, transform_indices = @transform_4, window_bounds = array<i64: 1, 128>}, {pipeline_mode = #tpu.pipeline_mode<synchronous>, transform_indices = @transform_5, window_bounds = array<i64: 128, 128>}, {pipeline_mode = #tpu.pipeline_mode<synchronous>, transform_indices = @transform_6, window_bounds = array<i64: 1, 128>}, {transform_indices = @transform_7, window_bounds = array<i64: 16, 128>}]} {
    %c0_i32 = arith.constant 0 : i32
    %0 = arith.cmpi eq, %arg1, %c0_i32 : i32
    %1 = arith.extui %0 : i1 to i32
    %c0_i32_0 = arith.constant 0 : i32
    %2 = arith.cmpi ne, %1, %c0_i32_0 : i32
    scf.if %2 {
      %c0_17 = arith.constant 0 : index
      %c0_18 = arith.constant 0 : index
      %28 = vector.load %arg3[%c0_17, %c0_18] : memref<1x32xf32, #tpu.memory_space<vmem>>, vector<1x32xf32>
      %c0_19 = arith.constant 0 : index
      %c0_20 = arith.constant 0 : index
      %29 = vector.load %arg4[%c0_19, %c0_20] : memref<1x32xf32, #tpu.memory_space<vmem>>, vector<1x32xf32>
      %c0_21 = arith.constant 0 : index
      %c0_22 = arith.constant 0 : index
      %30 = vector.load %arg2[%c0_21, %c0_22] : memref<16x128xf32, #tpu.memory_space<vmem>>, vector<16x128xf32>
      %31 = vector.extract_strided_slice %30 {offsets = [0, 0], sizes = [16, 32], strides = [1, 1]} : vector<16x128xf32> to vector<16x32xf32>
      %cst_23 = arith.constant dense<0.000000e+00> : vector<16xf32>
      %32 = vector.multi_reduction <add>, %31, %cst_23 [1] : vector<16x32xf32> to vector<16xf32>
      %33 = vector.shape_cast %32 : vector<16xf32> to vector<16x1xf32>
      %cst_24 = arith.constant 3.200000e+01 : f32
      %34 = vector.broadcast %cst_24 : f32 to vector<16x1xf32>
      %35 = arith.divf %33, %34 : vector<16x1xf32>
      %36 = vector.broadcast %35 : vector<16x1xf32> to vector<16x32xf32>
      %37 = arith.subf %31, %36 : vector<16x32xf32>
      %38 = arith.mulf %37, %37 : vector<16x32xf32>
      %cst_25 = arith.constant dense<0.000000e+00> : vector<16xf32>
      %39 = vector.multi_reduction <add>, %38, %cst_25 [1] : vector<16x32xf32> to vector<16xf32>
      %40 = vector.shape_cast %39 : vector<16xf32> to vector<16x1xf32>
      %cst_26 = arith.constant 3.200000e+01 : f32
      %41 = vector.broadcast %cst_26 : f32 to vector<16x1xf32>
      %42 = arith.divf %40, %41 : vector<16x1xf32>
      %cst_27 = arith.constant 9.99999997E-7 : f32
      %43 = vector.broadcast %cst_27 : f32 to vector<16x1xf32>
      %44 = arith.addf %42, %43 : vector<16x1xf32>
      %45 = math.rsqrt %44 : vector<16x1xf32>
      %46 = vector.broadcast %45 : vector<16x1xf32> to vector<16x32xf32>
      %47 = arith.mulf %37, %46 : vector<16x32xf32>
      %48 = vector.broadcast %28 : vector<1x32xf32> to vector<16x32xf32>
      %49 = arith.mulf %47, %48 : vector<16x32xf32>
      %50 = vector.broadcast %29 : vector<1x32xf32> to vector<16x32xf32>
      %51 = arith.addf %49, %50 : vector<16x32xf32>
      %52 = vector.extract_strided_slice %30 {offsets = [0, 32], sizes = [16, 32], strides = [1, 1]} : vector<16x128xf32> to vector<16x32xf32>
      %cst_28 = arith.constant dense<0.000000e+00> : vector<16xf32>
      %53 = vector.multi_reduction <add>, %52, %cst_28 [1] : vector<16x32xf32> to vector<16xf32>
      %54 = vector.shape_cast %53 : vector<16xf32> to vector<16x1xf32>
      %cst_29 = arith.constant 3.200000e+01 : f32
      %55 = vector.broadcast %cst_29 : f32 to vector<16x1xf32>
      %56 = arith.divf %54, %55 : vector<16x1xf32>
      %57 = vector.broadcast %56 : vector<16x1xf32> to vector<16x32xf32>
      %58 = arith.subf %52, %57 : vector<16x32xf32>
      %59 = arith.mulf %58, %58 : vector<16x32xf32>
      %cst_30 = arith.constant dense<0.000000e+00> : vector<16xf32>
      %60 = vector.multi_reduction <add>, %59, %cst_30 [1] : vector<16x32xf32> to vector<16xf32>
      %61 = vector.shape_cast %60 : vector<16xf32> to vector<16x1xf32>
      %cst_31 = arith.constant 3.200000e+01 : f32
      %62 = vector.broadcast %cst_31 : f32 to vector<16x1xf32>
      %63 = arith.divf %61, %62 : vector<16x1xf32>
      %cst_32 = arith.constant 9.99999997E-7 : f32
      %64 = vector.broadcast %cst_32 : f32 to vector<16x1xf32>
      %65 = arith.addf %63, %64 : vector<16x1xf32>
      %66 = math.rsqrt %65 : vector<16x1xf32>
      %67 = vector.broadcast %66 : vector<16x1xf32> to vector<16x32xf32>
      %68 = arith.mulf %58, %67 : vector<16x32xf32>
      %69 = vector.broadcast %28 : vector<1x32xf32> to vector<16x32xf32>
      %70 = arith.mulf %68, %69 : vector<16x32xf32>
      %71 = vector.broadcast %29 : vector<1x32xf32> to vector<16x32xf32>
      %72 = arith.addf %70, %71 : vector<16x32xf32>
      %73 = vector.extract_strided_slice %30 {offsets = [0, 64], sizes = [16, 32], strides = [1, 1]} : vector<16x128xf32> to vector<16x32xf32>
      %cst_33 = arith.constant dense<0.000000e+00> : vector<16xf32>
      %74 = vector.multi_reduction <add>, %73, %cst_33 [1] : vector<16x32xf32> to vector<16xf32>
      %75 = vector.shape_cast %74 : vector<16xf32> to vector<16x1xf32>
      %cst_34 = arith.constant 3.200000e+01 : f32
      %76 = vector.broadcast %cst_34 : f32 to vector<16x1xf32>
      %77 = arith.divf %75, %76 : vector<16x1xf32>
      %78 = vector.broadcast %77 : vector<16x1xf32> to vector<16x32xf32>
      %79 = arith.subf %73, %78 : vector<16x32xf32>
      %80 = arith.mulf %79, %79 : vector<16x32xf32>
      %cst_35 = arith.constant dense<0.000000e+00> : vector<16xf32>
      %81 = vector.multi_reduction <add>, %80, %cst_35 [1] : vector<16x32xf32> to vector<16xf32>
      %82 = vector.shape_cast %81 : vector<16xf32> to vector<16x1xf32>
      %cst_36 = arith.constant 3.200000e+01 : f32
      %83 = vector.broadcast %cst_36 : f32 to vector<16x1xf32>
      %84 = arith.divf %82, %83 : vector<16x1xf32>
      %cst_37 = arith.constant 9.99999997E-7 : f32
      %85 = vector.broadcast %cst_37 : f32 to vector<16x1xf32>
      %86 = arith.addf %84, %85 : vector<16x1xf32>
      %87 = math.rsqrt %86 : vector<16x1xf32>
      %88 = vector.broadcast %87 : vector<16x1xf32> to vector<16x32xf32>
      %89 = arith.mulf %79, %88 : vector<16x32xf32>
      %90 = vector.broadcast %28 : vector<1x32xf32> to vector<16x32xf32>
      %91 = arith.mulf %89, %90 : vector<16x32xf32>
      %92 = vector.broadcast %29 : vector<1x32xf32> to vector<16x32xf32>
      %93 = arith.addf %91, %92 : vector<16x32xf32>
      %94 = vector.extract_strided_slice %30 {offsets = [0, 96], sizes = [16, 32], strides = [1, 1]} : vector<16x128xf32> to vector<16x32xf32>
      %cst_38 = arith.constant dense<0.000000e+00> : vector<16xf32>
      %95 = vector.multi_reduction <add>, %94, %cst_38 [1] : vector<16x32xf32> to vector<16xf32>
      %96 = vector.shape_cast %95 : vector<16xf32> to vector<16x1xf32>
      %cst_39 = arith.constant 3.200000e+01 : f32
      %97 = vector.broadcast %cst_39 : f32 to vector<16x1xf32>
      %98 = arith.divf %96, %97 : vector<16x1xf32>
      %99 = vector.broadcast %98 : vector<16x1xf32> to vector<16x32xf32>
      %100 = arith.subf %94, %99 : vector<16x32xf32>
      %101 = arith.mulf %100, %100 : vector<16x32xf32>
      %cst_40 = arith.constant dense<0.000000e+00> : vector<16xf32>
      %102 = vector.multi_reduction <add>, %101, %cst_40 [1] : vector<16x32xf32> to vector<16xf32>
      %103 = vector.shape_cast %102 : vector<16xf32> to vector<16x1xf32>
      %cst_41 = arith.constant 3.200000e+01 : f32
      %104 = vector.broadcast %cst_41 : f32 to vector<16x1xf32>
      %105 = arith.divf %103, %104 : vector<16x1xf32>
      %cst_42 = arith.constant 9.99999997E-7 : f32
      %106 = vector.broadcast %cst_42 : f32 to vector<16x1xf32>
      %107 = arith.addf %105, %106 : vector<16x1xf32>
      %108 = math.rsqrt %107 : vector<16x1xf32>
      %109 = vector.broadcast %108 : vector<16x1xf32> to vector<16x32xf32>
      %110 = arith.mulf %100, %109 : vector<16x32xf32>
      %111 = vector.broadcast %28 : vector<1x32xf32> to vector<16x32xf32>
      %112 = arith.mulf %110, %111 : vector<16x32xf32>
      %113 = vector.broadcast %29 : vector<1x32xf32> to vector<16x32xf32>
      %114 = arith.addf %112, %113 : vector<16x32xf32>
      %115 = tpu.concatenate %51, %72, %93, %114 in 1 : vector<16x32xf32>, vector<16x32xf32>, vector<16x32xf32>, vector<16x32xf32> -> vector<16x128xf32>
      %c0_43 = arith.constant 0 : index
      %c0_44 = arith.constant 0 : index
      %116 = vector.load %arg10[%c0_43, %c0_44] : memref<16x128xf32, #tpu.memory_space<vmem>>, vector<16x128xf32>
      tpu.vector_store %arg10[%c0_43, %c0_44], %115 {strides = array<i32>} : memref<16x128xf32, #tpu.memory_space<vmem>>, vector<16x128xf32>,
    } else {
    }
    %c0 = arith.constant 0 : index
    %c0_1 = arith.constant 0 : index
    %3 = vector.load %arg10[%c0, %c0_1] : memref<16x128xf32, #tpu.memory_space<vmem>>, vector<16x128xf32>
    %c0_2 = arith.constant 0 : index
    %c0_3 = arith.constant 0 : index
    %4 = vector.load %arg5[%c0_2, %c0_3] : memref<128x128xf32, #tpu.memory_space<vmem>>, vector<128x128xf32>
    %cst = arith.constant dense<0.000000e+00> : vector<16x128xf32>
    %5 = tpu.matmul %3, %4, %cst {dimension_numbers = #tpu.dot_dimension_numbers<[1], [0], [0], [1], [0, 0, 1, 1], [], []>} : vector<16x128xf32>, vector<128x128xf32>, vector<16x128xf32> -> vector<16x128xf32>
    %c0_4 = arith.constant 0 : index
    %c0_5 = arith.constant 0 : index
    %6 = vector.load %arg6[%c0_4, %c0_5] : memref<1x128xf32, #tpu.memory_space<vmem>>, vector<1x128xf32>
    %7 = vector.broadcast %6 : vector<1x128xf32> to vector<16x128xf32>
    %8 = arith.addf %5, %7 : vector<16x128xf32>
    %cst_6 = arith.constant 5.000000e-01 : f32
    %9 = vector.broadcast %cst_6 : f32 to vector<16x128xf32>
    %10 = arith.mulf %9, %8 : vector<16x128xf32>
    %cst_7 = arith.constant 4.471500e-02 : f32
    %11 = vector.broadcast %cst_7 : f32 to vector<16x128xf32>
    %12 = arith.mulf %11, %8 : vector<16x128xf32>
    %13 = arith.mulf %12, %8 : vector<16x128xf32>
    %14 = arith.mulf %13, %8 : vector<16x128xf32>
    %15 = arith.addf %8, %14 : vector<16x128xf32>
    %cst_8 = arith.constant 0.797884583 : f32
    %16 = vector.broadcast %cst_8 : f32 to vector<16x128xf32>
    %17 = arith.mulf %16, %15 : vector<16x128xf32>
    %18 = math.tanh %17 : vector<16x128xf32>
    %cst_9 = arith.constant 1.000000e+00 : f32
    %19 = vector.broadcast %cst_9 : f32 to vector<16x128xf32>
    %20 = arith.addf %19, %18 : vector<16x128xf32>
    %21 = arith.mulf %10, %20 : vector<16x128xf32>
    %c0_10 = arith.constant 0 : index
    %c0_11 = arith.constant 0 : index
    %22 = vector.load %arg7[%c0_10, %c0_11] : memref<128x128xf32, #tpu.memory_space<vmem>>, vector<128x128xf32>
    %cst_12 = arith.constant dense<0.000000e+00> : vector<16x128xf32>
    %23 = tpu.matmul %21, %22, %cst_12 {dimension_numbers = #tpu.dot_dimension_numbers<[1], [0], [0], [1], [0, 0, 1, 1], [], []>} : vector<16x128xf32>, vector<128x128xf32>, vector<16x128xf32> -> vector<16x128xf32>
    %c0_13 = arith.constant 0 : index
    %c0_14 = arith.constant 0 : index
    %24 = vector.load %arg8[%c0_13, %c0_14] : memref<1x128xf32, #tpu.memory_space<vmem>>, vector<1x128xf32>
    %25 = vector.broadcast %24 : vector<1x128xf32> to vector<16x128xf32>
    %26 = arith.addf %23, %25 : vector<16x128xf32>
    %c0_15 = arith.constant 0 : index
    %c0_16 = arith.constant 0 : index
    %27 = vector.load %arg9[%c0_15, %c0_16] : memref<16x128xf32, #tpu.memory_space<vmem>>, vector<16x128xf32>
    tpu.vector_store %arg9[%c0_15, %c0_16], %26 {strides = array<i32>} : memref<16x128xf32, #tpu.memory_space<vmem>>, vector<16x128xf32>,
    return
  }
  func.func @transform_0(%arg0: i32, %arg1: i32) -> (i32, i32) {
    %c0_i32 = arith.constant 0 : i32
    %c0_i32_0 = arith.constant 0 : i32
    return %arg0, %c0_i32 : i32, i32
  }
  func.func @transform_1(%arg0: i32, %arg1: i32) -> (i32, i32) {
    %c0_i32 = arith.constant 0 : i32
    %c0_i32_0 = arith.constant 0 : i32
    %c0_i32_1 = arith.constant 0 : i32
    return %c0_i32, %c0_i32_0 : i32, i32
  }
  func.func @transform_2(%arg0: i32, %arg1: i32) -> (i32, i32) {
    %c0_i32 = arith.constant 0 : i32
    %c0_i32_0 = arith.constant 0 : i32
    %c0_i32_1 = arith.constant 0 : i32
    return %c0_i32, %c0_i32_0 : i32, i32
  }
  func.func @transform_3(%arg0: i32, %arg1: i32) -> (i32, i32) {
    %c0_i32 = arith.constant 0 : i32
    %c0_i32_0 = arith.constant 0 : i32
    return %c0_i32, %arg1 : i32, i32
  }
  func.func @transform_4(%arg0: i32, %arg1: i32) -> (i32, i32) {
    %c0_i32 = arith.constant 0 : i32
    %c0_i32_0 = arith.constant 0 : i32
    return %c0_i32, %arg1 : i32, i32
  }
  func.func @transform_5(%arg0: i32, %arg1: i32) -> (i32, i32) {
    %c0_i32 = arith.constant 0 : i32
    %c0_i32_0 = arith.constant 0 : i32
    return %arg1, %c0_i32 : i32, i32
  }
  func.func @transform_6(%arg0: i32, %arg1: i32) -> (i32, i32) {
    %c0_i32 = arith.constant 0 : i32
    %c0_i32_0 = arith.constant 0 : i32
    %c0_i32_1 = arith.constant 0 : i32
    return %c0_i32, %c0_i32_0 : i32, i32
  }
  func.func @transform_7(%arg0: i32, %arg1: i32) -> (i32, i32) {
    %c0_i32 = arith.constant 0 : i32
    %c0_i32_0 = arith.constant 0 : i32
    return %arg0, %c0_i32 : i32, i32
  }
}

</mosaic_0001>

<llo_original>
// kernel: tpu_custom_call.1
$region0: #{tpu_custom_call.1}
  #allocation0 [shape = 'u32[]', space=smem, size = 0x4, offset = 0x4, fixed_abs, tag = 'smem constant byte address 0x4 - core index']
  #allocation1 [shape = 'u32[72,128]{1,0:T(1,128)}', space=vmem, size = 0x9000, scoped, tag = 'internal scratch']
  #allocation2 [shape = 'f32[16,128]{1,0:T(8,128)}', space=vmem, size = 0x2000, scoped, tag = 'scratch operand']
  %s0 = inlined_call_operand.hbm [shape: f32[16,128], index: 0, kind: input, shape index: {}]
  %s1 = inlined_call_operand.hbm [shape: f32[1,32], index: 1, kind: input, shape index: {}]
  %s2 = inlined_call_operand.vmem [shape: f32[1,32], index: 2, kind: input, shape index: {}]
  %s3 = inlined_call_operand.hbm [shape: f32[128,128], index: 3, kind: input, shape index: {}]
  %s4 = inlined_call_operand.vmem [shape: f32[1,128], index: 4, kind: input, shape index: {}]
  %s5 = inlined_call_operand.hbm [shape: f32[128,128], index: 5, kind: input, shape index: {}]
  %s6 = inlined_call_operand.vmem [shape: f32[1,128], index: 6, kind: input, shape index: {}]
  %s7 = inlined_call_operand.hbm [shape: f32[16,128], index: 7, kind: output, shape index: {}]
  %s8 = sld [smem:[#allocation0]]
  $region58: #{tpu_custom_call.1} parent=0
    _
  %s10 = ssub.s32 1, %s8
  %s11 = scalar_select 0, %s10, %s8
  $region1: #{tpu_custom_call.1} parent=0
    #allocation3 [shape = 'u8[8192]{0}', space=vmem, size = 0x2000, scoped, tag = 'input window, operand 0, single buffered']
    #allocation4 [shape = 's32[1]{0}', space=sflag, size = 0x4, scoped, tag = 'scoped memory for tpu_custom_call.1']
    #allocation5 [shape = 's32[1]{0}', space=sflag, size = 0x4, scoped, tag = 'scoped memory for tpu_custom_call.1']
    #allocation6 [shape = 'u8[512]{0}', space=vmem, size = 0x400, scoped, tag = 'input window, operand 1, single buffered']
    #allocation7 [shape = 's32[1]{0}', space=sflag, size = 0x4, scoped, tag = 'scoped memory for tpu_custom_call.1']
    #allocation8 [shape = 'u8[65536]{0}', space=vmem, size = 0x10000, scoped, tag = 'input window, operand 3, single buffered']
    #allocation9 [shape = 'u8[65536]{0}', space=vmem, size = 0x10000, scoped, tag = 'input window, operand 5, single buffered']
    #allocation10 [shape = 's32[1]{0}', space=sflag, size = 0x4, scoped, tag = 'scoped memory for tpu_custom_call.1']
    #allocation11 [shape = 'u8[8192]{0}', space=vmem, size = 0x2000, scoped, tag = 'output window, operand 0, single buffered']
    %12 = vsyncpa [#allocation4], 0
    %13 = vsyncpa [#allocation7], 0
    %14 = vsyncpa [#allocation10], 0
    %15 = vsyncpa [#allocation5], 0
    // Predicated region
    $region2: #{tpu_custom_call.1} parent=1 // pred_check
      _
    $region3: #{tpu_custom_call.1} parent=1 // pred_check_branch
      %17 = sbr.rel (0) target = $region5
    $region4: #{tpu_custom_call.1} parent=1 // pred_region
      %19 = vsyncadd [#allocation4], 0
      %s20 = sshll.u32 %s0, 4
      %s21 = int_to_ptr.hbm [resolvable:$true] %s20
      %s22 = sshll.u32 [#allocation3], 4
      %s23 = int_to_ptr.vmem [resolvable:$true] %s22
      %28 = dma.hbm_to_vmem [thread:$0]  %s21, 256, %s23, [#allocation4], 128, 128, 8
    $region5: #{tpu_custom_call.1} parent=1 // pred_fallthru
      _
    // Predicated region
    $region6: #{tpu_custom_call.1} parent=1 // pred_check
      _
    $region7: #{tpu_custom_call.1} parent=1 // pred_check_branch
      %30 = sbr.rel (0) target = $region9
    $region8: #{tpu_custom_call.1} parent=1 // pred_region
      %32 = vsyncadd [#allocation7], 0
      %s34 = sshll.u32 %s1, 4
      %s35 = int_to_ptr.hbm [resolvable:$true] %s34
      %s36 = sshll.u32 [#allocation6], 4
      %s37 = int_to_ptr.vmem [resolvable:$true] %s36
      %39 = dma.hbm_to_vmem [thread:$0]  %s35, 16, %s37, [#allocation7]
    $region9: #{tpu_custom_call.1} parent=1 // pred_fallthru
      _
    // Predicated region
    $region10: #{tpu_custom_call.1} parent=1 // pred_check
      _
    $region11: #{tpu_custom_call.1} parent=1 // pred_check_branch
      %41 = sbr.rel (0) target = $region13
    $region12: #{tpu_custom_call.1} parent=1 // pred_region
      _
    $region13: #{tpu_custom_call.1} parent=1 // pred_fallthru
      _
    // Predicated region
    $region14: #{tpu_custom_call.1} parent=1 // pred_check
      _
    $region15: #{tpu_custom_call.1} parent=1 // pred_check_branch
      %43 = sbr.rel (0) target = $region17
    $region16: #{tpu_custom_call.1} parent=1 // pred_region
      %45 = vsyncadd [#allocation7], 0
      %s46 = sshll.u32 %s3, 4
      %s47 = int_to_ptr.hbm [resolvable:$true] %s46
      %s48 = sshll.u32 [#allocation8], 4
      %s49 = int_to_ptr.vmem [resolvable:$true] %s48
      %54 = dma.hbm_to_vmem [thread:$0]  %s47, 2048, %s49, [#allocation7], 128, 128, 8
    $region17: #{tpu_custom_call.1} parent=1 // pred_fallthru
      _
    // Predicated region
    $region18: #{tpu_custom_call.1} parent=1 // pred_check
      _
    $region19: #{tpu_custom_call.1} parent=1 // pred_check_branch
      %56 = sbr.rel (0) target = $region21
    $region20: #{tpu_custom_call.1} parent=1 // pred_region
      _
    $region21: #{tpu_custom_call.1} parent=1 // pred_fallthru
      _
    // Predicated region
    $region22: #{tpu_custom_call.1} parent=1 // pred_check
      _
    $region23: #{tpu_custom_call.1} parent=1 // pred_check_branch
      %58 = sbr.rel (0) target = $region25
    $region24: #{tpu_custom_call.1} parent=1 // pred_region
      %60 = vsyncadd [#allocation10], 0
      %s61 = sshll.u32 %s5, 4
      %s62 = int_to_ptr.hbm [resolvable:$true] %s61
      %s63 = sshll.u32 [#allocation9], 4
      %s64 = int_to_ptr.vmem [resolvable:$true] %s63
      %69 = dma.hbm_to_vmem [thread:$0]  %s62, 2048, %s64, [#allocation10], 128, 128, 8
    $region25: #{tpu_custom_call.1} parent=1 // pred_fallthru
      _
    // Predicated region
    $region26: #{tpu_custom_call.1} parent=1 // pred_check
      _
    $region27: #{tpu_custom_call.1} parent=1 // pred_check_branch
      %71 = sbr.rel (0) target = $region29
    $region28: #{tpu_custom_call.1} parent=1 // pred_region
      _
    $region29: #{tpu_custom_call.1} parent=1 // pred_fallthru
      _
    // Predicated region
    $region30: #{tpu_custom_call.1} parent=1 // pred_check
      _
    $region31: #{tpu_custom_call.1} parent=1 // pred_check_branch
      %73 = sbr.rel (0) target = $region33
    $region32: #{tpu_custom_call.1} parent=1 // pred_region
      %75 = dma.done [#allocation4], 256
    $region33: #{tpu_custom_call.1} parent=1 // pred_fallthru
      _
    // Predicated region
    $region34: #{tpu_custom_call.1} parent=1 // pred_check
      _
    $region35: #{tpu_custom_call.1} parent=1 // pred_check_branch
      %77 = sbr.rel (0) target = $region37
    $region36: #{tpu_custom_call.1} parent=1 // pred_region
      %79 = dma.done [#allocation7], 16
    $region37: #{tpu_custom_call.1} parent=1 // pred_fallthru
      _
    // Predicated region
    $region38: #{tpu_custom_call.1} parent=1 // pred_check
      _
    $region39: #{tpu_custom_call.1} parent=1 // pred_check_branch
      %81 = sbr.rel (0) target = $region41
    $region40: #{tpu_custom_call.1} parent=1 // pred_region
      %83 = dma.done [#allocation7], 2048
    $region41: #{tpu_custom_call.1} parent=1 // pred_fallthru
      _
    // Predicated region
    $region42: #{tpu_custom_call.1} parent=1 // pred_check
      _
    $region43: #{tpu_custom_call.1} parent=1 // pred_check_branch
      %85 = sbr.rel (0) target = $region45
    $region44: #{tpu_custom_call.1} parent=1 // pred_region
      %87 = dma.done [#allocation10], 2048
    $region45: #{tpu_custom_call.1} parent=1 // pred_fallthru
      _
    %p88 = scmp.eq.s32.totalorder 0, 0
    // Predicated region
    $region46: #{tpu_custom_call.1} parent=1 // pred_check
      %p89 = pneg %p88
    $region47: #{tpu_custom_call.1} parent=1 // pred_check_branch
      %91 = sbr.rel (%p89) target = $region49
    $region48: #{tpu_custom_call.1} parent=1 // pred_region
      %v92 = vld [vmem:[#allocation6] sm:$0x1]
      %v93 = vld [vmem:[%s2] sm:$0x1]
      %v94 = vld [vmem:[#allocation3] sm:$0xff]
      %v95 = vld [vmem:[#allocation3 + $0x8] sm:$0xff]
      %vm96 = vcmask 261120
      %v97 = vsel %vm96, %v94, 0.0
      %98 = vadd.xlane.f32.xlu0 %v97
      %v99 = vpop.xlane.xlu0 %98
      %v100 = vsel %vm96, %v95, 0.0
      %101 = vadd.xlane.f32.xlu0 %v100
      %v102 = vpop.xlane.xlu0 %101
      %v103 = vrcp.pop 32.0
      %v104 = vmul.f32 32.0, %v103
      %v105 = vsub.f32 1.0, %v104
      %v106 = vmul.f32 %v103, %v105
      %v107 = vadd.f32 %v103, %v106
      %vm108 = vweird.f32 %v103
      %v109 = vsel %vm108, %v103, %v107
      %v110 = vmul.f32 %v99, %v109
      %v111 = vmul.f32 %v102, %v109
      %v112 = vsub.f32 %v94, %v110
      %v113 = vsub.f32 %v95, %v111
      %v114 = vmul.f32 %v112, %v112
      %v115 = vmul.f32 %v113, %v113
      %v116 = vsel %vm96, %v114, 0.0
      %117 = vadd.xlane.f32.xlu0 %v116
      %v118 = vpop.xlane.xlu0 %117
      %v119 = vsel %vm96, %v115, 0.0
      %120 = vadd.xlane.f32.xlu0 %v119
      %v121 = vpop.xlane.xlu0 %120
      %v122 = vmul.f32 %v118, %v109
      %v123 = vmul.f32 %v121, %v109
      %v124 = vadd.f32 %v122, 1e-06
      %v125 = vadd.f32 %v123, 1e-06
      %v126 = vrsqrt.pop %v124
      %v127 = vmul.f32 %v126, %v124
      %v128 = vmul.f32 %v127, %v126
      %v129 = vmul.f32 0.5, %v128
      %v130 = vsub.f32 1.5, %v129
      %v131 = vmul.f32 %v126, %v130
      %vm132 = vweird.f32 %v124
      %vm133 = vweird.f32 %v126
      %vm134 = vmor %vm132, %vm133
      %v135 = vsel %vm134, %v126, %v131
      %v136 = vrsqrt.pop %v125
      %v137 = vmul.f32 %v136, %v125
      %v138 = vmul.f32 %v137, %v136
      %v139 = vmul.f32 0.5, %v138
      %v140 = vsub.f32 1.5, %v139
      %v141 = vmul.f32 %v136, %v140
      %vm142 = vweird.f32 %v125
      %vm143 = vweird.f32 %v136
      %vm144 = vmor %vm142, %vm143
      %v145 = vsel %vm144, %v136, %v141
      %v146 = vmul.f32 %v112, %v135
      %v147 = vmul.f32 %v113, %v145
      %v149 = vperm.slane %v92, 0
      %v151 = vmul.f32 %v146, %v149
      %v152 = vmul.f32 %v147, %v149
      %v154 = vperm.slane %v93, 0
      %v156 = vadd.f32 %v151, %v154
      %v157 = vadd.f32 %v152, %v154
      %160 = vrot.lane.b32.xlu0 %v94, 96
      %v161 = vpop.permute.xlu0 %160
      %162 = vrot.lane.b32.xlu0 %v95, 96
      %v163 = vpop.permute.xlu0 %162
      %v166 = vsel %vm96, %v161, 0.0
      %167 = vadd.xlane.f32.xlu0 %v166
      %v168 = vpop.xlane.xlu0 %167
      %v169 = vsel %vm96, %v163, 0.0
      %170 = vadd.xlane.f32.xlu0 %v169
      %v171 = vpop.xlane.xlu0 %170
      %v172 = vmul.f32 %v168, %v109
      %v173 = vmul.f32 %v171, %v109
      %v174 = vsub.f32 %v94, %v172
      %v175 = vsub.f32 %v95, %v173
      %v176 = vmul.f32 %v174, %v174
      %v177 = vmul.f32 %v175, %v175
      %180 = vrot.lane.b32.xlu0 %v176, 96
      %v181 = vpop.permute.xlu0 %180
      %182 = vrot.lane.b32.xlu0 %v177, 96
      %v183 = vpop.permute.xlu0 %182
      %v186 = vsel %vm96, %v181, 0.0
      %187 = vadd.xlane.f32.xlu0 %v186
      %v188 = vpop.xlane.xlu0 %187
      %v189 = vsel %vm96, %v183, 0.0
      %190 = vadd.xlane.f32.xlu0 %v189
      %v191 = vpop.xlane.xlu0 %190
      %v192 = vmul.f32 %v188, %v109
      %v193 = vmul.f32 %v191, %v109
      %v194 = vadd.f32 %v192, 1e-06
      %v195 = vadd.f32 %v193, 1e-06
      %v196 = vrsqrt.pop %v194
      %v197 = vmul.f32 %v196, %v194
      %v198 = vmul.f32 %v197, %v196
      %v199 = vmul.f32 0.5, %v198
      %v200 = vsub.f32 1.5, %v199
      %v201 = vmul.f32 %v196, %v200
      %vm202 = vweird.f32 %v194
      %vm203 = vweird.f32 %v196
      %vm204 = vmor %vm202, %vm203
      %v205 = vsel %vm204, %v196, %v201
      %v206 = vrsqrt.pop %v195
      %v207 = vmul.f32 %v206, %v195
      %v208 = vmul.f32 %v207, %v206
      %v209 = vmul.f32 0.5, %v208
      %v210 = vsub.f32 1.5, %v209
      %v211 = vmul.f32 %v206, %v210
      %vm212 = vweird.f32 %v195
      %vm213 = vweird.f32 %v206
      %vm214 = vmor %vm212, %vm213
      %v215 = vsel %vm214, %v206, %v211
      %v216 = vmul.f32 %v174, %v205
      %v217 = vmul.f32 %v175, %v215
      %218 = vrot.lane.b32.xlu0 %v149, 32
      %v219 = vpop.permute.xlu0 %218
      %v221 = vmul.f32 %v216, %v219
      %v222 = vmul.f32 %v217, %v219
      %223 = vrot.lane.b32.xlu0 %v154, 32
      %v224 = vpop.permute.xlu0 %223
      %v226 = vadd.f32 %v221, %v224
      %v227 = vadd.f32 %v222, %v224
      %228 = vrot.lane.b32.xlu0 %v94, 64
      %v229 = vpop.permute.xlu0 %228
      %230 = vrot.lane.b32.xlu0 %v95, 64
      %v231 = vpop.permute.xlu0 %230
      %v234 = vsel %vm96, %v229, 0.0
      %235 = vadd.xlane.f32.xlu0 %v234
      %v236 = vpop.xlane.xlu0 %235
      %v237 = vsel %vm96, %v231, 0.0
      %238 = vadd.xlane.f32.xlu0 %v237
      %v239 = vpop.xlane.xlu0 %238
      %v240 = vmul.f32 %v236, %v109
      %v241 = vmul.f32 %v239, %v109
      %v242 = vsub.f32 %v94, %v240
      %v243 = vsub.f32 %v95, %v241
      %v244 = vmul.f32 %v242, %v242
      %v245 = vmul.f32 %v243, %v243
      %248 = vrot.lane.b32.xlu0 %v244, 64
      %v249 = vpop.permute.xlu0 %248
      %250 = vrot.lane.b32.xlu0 %v245, 64
      %v251 = vpop.permute.xlu0 %250
      %v254 = vsel %vm96, %v249, 0.0
      %255 = vadd.xlane.f32.xlu0 %v254
      %v256 = vpop.xlane.xlu0 %255
      %v257 = vsel %vm96, %v251, 0.0
      %258 = vadd.xlane.f32.xlu0 %v257
      %v259 = vpop.xlane.xlu0 %258
      %v260 = vmul.f32 %v256, %v109
      %v261 = vmul.f32 %v259, %v109
      %v262 = vadd.f32 %v260, 1e-06
      %v263 = vadd.f32 %v261, 1e-06
      %v264 = vrsqrt.pop %v262
      %v265 = vmul.f32 %v264, %v262
      %v266 = vmul.f32 %v265, %v264
      %v267 = vmul.f32 0.5, %v266
      %v268 = vsub.f32 1.5, %v267
      %v269 = vmul.f32 %v264, %v268
      %vm270 = vweird.f32 %v262
      %vm271 = vweird.f32 %v264
      %vm272 = vmor %vm270, %vm271
      %v273 = vsel %vm272, %v264, %v269
      %v274 = vrsqrt.pop %v263
      %v275 = vmul.f32 %v274, %v263
      %v276 = vmul.f32 %v275, %v274
      %v277 = vmul.f32 0.5, %v276
      %v278 = vsub.f32 1.5, %v277
      %v279 = vmul.f32 %v274, %v278
      %vm280 = vweird.f32 %v263
      %vm281 = vweird.f32 %v274
      %vm282 = vmor %vm280, %vm281
      %v283 = vsel %vm282, %v274, %v279
      %v284 = vmul.f32 %v242, %v273
      %v285 = vmul.f32 %v243, %v283
      %286 = vrot.lane.b32.xlu0 %v149, 64
      %v287 = vpop.permute.xlu0 %286
      %v289 = vmul.f32 %v284, %v287
      %v290 = vmul.f32 %v285, %v287
      %291 = vrot.lane.b32.xlu0 %v154, 64
      %v292 = vpop.permute.xlu0 %291
      %v294 = vadd.f32 %v289, %v292
      %v295 = vadd.f32 %v290, %v292
      %296 = vrot.lane.b32.xlu0 %v94, 32
      %v297 = vpop.permute.xlu0 %296
      %298 = vrot.lane.b32.xlu0 %v95, 32
      %v299 = vpop.permute.xlu0 %298
      %v302 = vsel %vm96, %v297, 0.0
      %303 = vadd.xlane.f32.xlu0 %v302
      %v304 = vpop.xlane.xlu0 %303
      %v305 = vsel %vm96, %v299, 0.0
      %306 = vadd.xlane.f32.xlu0 %v305
      %v307 = vpop.xlane.xlu0 %306
      %v308 = vmul.f32 %v304, %v109
      %v309 = vmul.f32 %v307, %v109
      %v310 = vsub.f32 %v94, %v308
      %v311 = vsub.f32 %v95, %v309
      %v312 = vmul.f32 %v310, %v310
      %v313 = vmul.f32 %v311, %v311
      %316 = vrot.lane.b32.xlu0 %v312, 32
      %v317 = vpop.permute.xlu0 %316
      %318 = vrot.lane.b32.xlu0 %v313, 32
      %v319 = vpop.permute.xlu0 %318
      %v322 = vsel %vm96, %v317, 0.0
      %323 = vadd.xlane.f32.xlu0 %v322
      %v324 = vpop.xlane.xlu0 %323
      %v325 = vsel %vm96, %v319, 0.0
      %326 = vadd.xlane.f32.xlu0 %v325
      %v327 = vpop.xlane.xlu0 %326
      %v328 = vmul.f32 %v324, %v109
      %v329 = vmul.f32 %v327, %v109
      %v330 = vadd.f32 %v328, 1e-06
      %v331 = vadd.f32 %v329, 1e-06
      %v332 = vrsqrt.pop %v330
      %v333 = vmul.f32 %v332, %v330
      %v334 = vmul.f32 %v333, %v332
      %v335 = vmul.f32 0.5, %v334
      %v336 = vsub.f32 1.5, %v335
      %v337 = vmul.f32 %v332, %v336
      %vm338 = vweird.f32 %v330
      %vm339 = vweird.f32 %v332
      %vm340 = vmor %vm338, %vm339
      %v341 = vsel %vm340, %v332, %v337
      %v342 = vrsqrt.pop %v331
      %v343 = vmul.f32 %v342, %v331
      %v344 = vmul.f32 %v343, %v342
      %v345 = vmul.f32 0.5, %v344
      %v346 = vsub.f32 1.5, %v345
      %v347 = vmul.f32 %v342, %v346
      %vm348 = vweird.f32 %v331
      %vm349 = vweird.f32 %v342
      %vm350 = vmor %vm348, %vm349
      %v351 = vsel %vm350, %v342, %v347
      %v352 = vmul.f32 %v310, %v341
      %v353 = vmul.f32 %v311, %v351
      %354 = vrot.lane.b32.xlu0 %v149, 96
      %v355 = vpop.permute.xlu0 %354
      %v357 = vmul.f32 %v352, %v355
      %v358 = vmul.f32 %v353, %v355
      %359 = vrot.lane.b32.xlu0 %v154, 96
      %v360 = vpop.permute.xlu0 %359
      %v362 = vadd.f32 %v357, %v360
      %v363 = vadd.f32 %v358, %v360
      %v364 = vsel %vm96, %v156, %v226
      %v365 = vsel %vm96, %v157, %v227
      %vm366 = vcmask 523264
      %v367 = vsel %vm366, %v364, %v294
      %v368 = vsel %vm366, %v365, %v295
      %vm369 = vcmask 785408
      %v370 = vsel %vm369, %v367, %v362
      %v371 = vsel %vm369, %v368, %v363
      %372 = vst [vmem:[#allocation2] sm:$0xff] %v370
      %373 = vst [vmem:[#allocation2 + $0x8] sm:$0xff] %v371
    $region49: #{tpu_custom_call.1} parent=1 // pred_fallthru
      _
    %v374 = vld [vmem:[#allocation2] sm:$0xff]
    %v375 = vld [vmem:[#allocation2 + $0x8] sm:$0xff]
    %v376 = vld [vmem:[#allocation8] sm:$0xff]
    %v377 = vld [vmem:[#allocation8 + $0x8] sm:$0xff]
    %v378 = vld [vmem:[#allocation8 + $0x10] sm:$0xff]
    %v379 = vld [vmem:[#allocation8 + $0x18] sm:$0xff]
    %v380 = vld [vmem:[#allocation8 + $0x20] sm:$0xff]
    %v381 = vld [vmem:[#allocation8 + $0x28] sm:$0xff]
    %v382 = vld [vmem:[#allocation8 + $0x30] sm:$0xff]
    %v383 = vld [vmem:[#allocation8 + $0x38] sm:$0xff]
    %v384 = vld [vmem:[#allocation8 + $0x40] sm:$0xff]
    %v385 = vld [vmem:[#allocation8 + $0x48] sm:$0xff]
    %v386 = vld [vmem:[#allocation8 + $0x50] sm:$0xff]
    %v387 = vld [vmem:[#allocation8 + $0x58] sm:$0xff]
    %v388 = vld [vmem:[#allocation8 + $0x60] sm:$0xff]
    %v389 = vld [vmem:[#allocation8 + $0x68] sm:$0xff]
    %v390 = vld [vmem:[#allocation8 + $0x70] sm:$0xff]
    %v391 = vld [vmem:[#allocation8 + $0x78] sm:$0xff]
    %v392 = vld [vmem:[%s4] sm:$0x1]
    %v394 = vperm.slane %v392, 0
    %396 = vmatpush.msra.mxu0 %v391
    %397 = vmatpush.msra.mxu0 %v390
    %398 = vmatpush.msra.mxu0 %v389
    %399 = vmatpush.msra.mxu0 %v388
    %400 = vmatpush.msra.mxu0 %v387
    %401 = vmatpush.msra.mxu0 %v386
    %402 = vmatpush.msra.mxu0 %v385
    %403 = vmatpush.msra.mxu0 %v384
    %404 = vmatpush.msra.mxu0 %v383
    %405 = vmatpush.msra.mxu0 %v382
    %406 = vmatpush.msra.mxu0 %v381
    %407 = vmatpush.msra.mxu0 %v380
    %408 = vmatpush.msra.mxu0 %v379
    %409 = vmatpush.msra.mxu0 %v378
    %410 = vmatpush.msra.mxu0 %v377
    %411 = vmatpush.msra.mxu0 %v376
    %412 = vmatmul.f32.gmra.mxu0 %v374
    %v413 = vpop.f32.mrf.mxu0
    %v414 = vadd.f32 %v394, %v413
    %415 = vmatmul.f32.gmra.mxu0 %v375
    %v416 = vpop.f32.mrf.mxu0
    %v417 = vadd.f32 %v394, %v416
    %418 = vdwg.mxu0
    %v419 = vmul.f32 %v414, 0.5
    %v420 = vmul.f32 %v417, 0.5
    %v421 = vmul.f32 %v414, 0.044715
    %v422 = vmul.f32 %v417, 0.044715
    %v423 = vmul.f32 %v421, %v414
    %v424 = vmul.f32 %v422, %v417
    %v425 = vmul.f32 %v423, %v414
    %v426 = vmul.f32 %v424, %v417
    %v427 = vadd.f32 %v414, %v425
    %v428 = vadd.f32 %v417, %v426
    %v429 = vmul.f32 %v427, 0.7978846
    %v430 = vmul.f32 %v428, 0.7978846
    %v431 = vtanh.pop %v429
    %v432 = vtanh.pop %v430
    %v433 = vadd.f32 %v431, 1.0
    %v434 = vadd.f32 %v432, 1.0
    %v435 = vmul.f32 %v419, %v433
    %v436 = vmul.f32 %v420, %v434
    %v437 = vld [vmem:[#allocation9] sm:$0xff]
    %v438 = vld [vmem:[#allocation9 + $0x8] sm:$0xff]
    %v439 = vld [vmem:[#allocation9 + $0x10] sm:$0xff]
    %v440 = vld [vmem:[#allocation9 + $0x18] sm:$0xff]
    %v441 = vld [vmem:[#allocation9 + $0x20] sm:$0xff]
    %v442 = vld [vmem:[#allocation9 + $0x28] sm:$0xff]
    %v443 = vld [vmem:[#allocation9 + $0x30] sm:$0xff]
    %v444 = vld [vmem:[#allocation9 + $0x38] sm:$0xff]
    %v445 = vld [vmem:[#allocation9 + $0x40] sm:$0xff]
    %v446 = vld [vmem:[#allocation9 + $0x48] sm:$0xff]
    %v447 = vld [vmem:[#allocation9 + $0x50] sm:$0xff]
    %v448 = vld [vmem:[#allocation9 + $0x58] sm:$0xff]
    %v449 = vld [vmem:[#allocation9 + $0x60] sm:$0xff]
    %v450 = vld [vmem:[#allocation9 + $0x68] sm:$0xff]
    %v451 = vld [vmem:[#allocation9 + $0x70] sm:$0xff]
    %v452 = vld [vmem:[#allocation9 + $0x78] sm:$0xff]
    %v453 = vld [vmem:[%s6] sm:$0x1]
    %v455 = vperm.slane %v453, 0
    %457 = vmatpush.msra.mxu0 %v452
    %458 = vmatpush.msra.mxu0 %v451
    %459 = vmatpush.msra.mxu0 %v450
    %460 = vmatpush.msra.mxu0 %v449
    %461 = vmatpush.msra.mxu0 %v448
    %462 = vmatpush.msra.mxu0 %v447
    %463 = vmatpush.msra.mxu0 %v446
    %464 = vmatpush.msra.mxu0 %v445
    %465 = vmatpush.msra.mxu0 %v444
    %466 = vmatpush.msra.mxu0 %v443
    %467 = vmatpush.msra.mxu0 %v442
    %468 = vmatpush.msra.mxu0 %v441
    %469 = vmatpush.msra.mxu0 %v440
    %470 = vmatpush.msra.mxu0 %v439
    %471 = vmatpush.msra.mxu0 %v438
    %472 = vmatpush.msra.mxu0 %v437
    %473 = vmatmul.f32.gmra.mxu0 %v435
    %v474 = vpop.f32.mrf.mxu0
    %v475 = vadd.f32 %v455, %v474
    %476 = vmatmul.f32.gmra.mxu0 %v436
    %v477 = vpop.f32.mrf.mxu0
    %v478 = vadd.f32 %v455, %v477
    %479 = vdwg.mxu0
    %480 = vst [vmem:[#allocation11] sm:$0xff] %v475
    %481 = vst [vmem:[#allocation11 + $0x8] sm:$0xff] %v478
    // Predicated region
    $region50: #{tpu_custom_call.1} parent=1 // pred_check
      _
    $region51: #{tpu_custom_call.1} parent=1 // pred_check_branch
      %483 = sbr.rel (0) target = $region53
    $region52: #{tpu_custom_call.1} parent=1 // pred_region
      %485 = vsyncadd [#allocation5], 0
      %s486 = sshll.u32 [#allocation11], 4
      %s487 = int_to_ptr.vmem [resolvable:$true] %s486
      %s488 = sshll.u32 %s7, 4
      %s489 = int_to_ptr.hbm [resolvable:$true] %s488
      %494 = dma.vmem_to_hbm [thread:$0]  %s487, 256, %s489, [#allocation5], 128, 128, 8
    $region53: #{tpu_custom_call.1} parent=1 // pred_fallthru
      _
    // Predicated region
    $region54: #{tpu_custom_call.1} parent=1 // pred_check
      _
    $region55: #{tpu_custom_call.1} parent=1 // pred_check_branch
      %496 = sbr.rel (0) target = $region57
    $region56: #{tpu_custom_call.1} parent=1 // pred_region
      %498 = dma.done [#allocation5], 256
    $region57: #{tpu_custom_call.1} parent=1 // pred_fallthru
      _
    %499 = vsyncpa [#allocation4], 1
    %500 = vsyncpa [#allocation7], 1
    %501 = vsyncpa [#allocation10], 1
    %502 = vsyncpa [#allocation5], 1

</llo_original>
